<compile_context>
chip_gen: v5e
topology: v5e:2x2
jax: 0.10.0
libtpu: 0.0.40
codegen_flags: <defaults>
</compile_context>

<pallas_src>
import jax
import jax.numpy as jnp
from jax.experimental import pallas as pl
from jax.experimental.pallas import tpu as pltpu

BN_EPS = 1e-5


def mlp_kernel(x_ref, w1_ref, gamma_ref, beta_ref, w2_ref, b2_ref, o_ref):
    c = pl.program_id(0)   # core-split index ("parallel" axis)
    t = pl.program_id(1)   # hidden-tile index within the split ("arbitrary" / reduction)

    # ---- init the resident f32 output block; split 0 carries the layer-2 bias so
    #      the wrapper-side sum of partials is exact ----
    @pl.when(t == 0)
    def _():
        b2row = b2_ref[...].astype(jnp.float32)
        b2row = jnp.where(c == 0, b2row, jnp.zeros_like(b2row))
        o_ref[...] = jnp.broadcast_to(b2row, o_ref.shape)

    # ---- layer1: x @ W1_tile   (bf16 operands, f32 MXU accumulation) ----
    # b1 intentionally omitted: exactly cancelled by train-mode BN mean subtraction.
    x = x_ref[...]
    if x.dtype != w1_ref.dtype:
        x = x.astype(w1_ref.dtype)
    h = jnp.dot(x, w1_ref[...], preferred_element_type=jnp.float32)        # (B, TH) f32

    # ---- BatchNorm1d (training mode, biased variance, eps=1e-5), fused scale/shift ----
    inv_b = 1.0 / h.shape[0]
    s = jnp.sum(h, axis=0, keepdims=True)                                  # (1, TH)
    ss = jnp.sum(h * h, axis=0, keepdims=True)                             # (1, TH)
    mean = s * inv_b
    var = jnp.maximum(ss * inv_b - mean * mean, 0.0)   # guard catastrophic cancellation
    scale = gamma_ref[...].astype(jnp.float32) * jax.lax.rsqrt(var + BN_EPS)
    shift = beta_ref[...].astype(jnp.float32) - mean * scale

    # ---- fused normalize + affine + ReLU: one FMA-style pass over (B, TH) ----
    h = jnp.maximum(h * scale + shift, 0.0)

    # ---- layer2 partial: accumulate h_tile @ W2_tile directly into the f32 output ----
    o_ref[...] += jnp.dot(h.astype(w2_ref.dtype), w2_ref[...],
                          preferred_element_type=jnp.float32)


def _pick_tile_h(per_split_hidden):
    # Big tiles amortize ~0.35 us/grid-step overhead and give 2-8 MiB weight DMA slabs;
    # prefer multiples of 256 to fill the 256x256 MXUs of v6e/v7x (128 = v5e fallback).
    for t in (2048, 1024, 512, 256, 128):
        if per_split_hidden % t == 0:
            return t
    return per_split_hidden


def _vmem_limit_bytes():
    # ~75% of physical VMEM: ~48 MiB on v7x (64 MiB), ~96 MiB on v5e/v6e (128 MiB).
    cap = 128 * 1024 * 1024
    try:
        cap = int(pltpu.get_tpu_info().vmem_capacity_bytes)
    except Exception:
        pass
    return int(min((cap * 3) // 4, 96 * 1024 * 1024))


def byol_mlp(x, w1, b1, gamma, beta, w2, b2, *, tile_h=None, num_core_splits=1,
             weight_buffers=2):
    """Fused BYOL MLP forward (train-mode BN).

    Weights are (fan_in, fan_out) and should already be in the MXU compute dtype
    (bf16 recommended) -- the wrapper performs no per-call weight casts.
    b1 is accepted but unused (exactly cancelled by train-mode BatchNorm); this
    function does not produce running statistics and must not be used for eval-mode BN.
    Set num_core_splits=2 on v7x to use both TensorCores (exact partial-sum split of
    the hidden reduction); weight_buffers=3 can hide DMA jitter on v5e.
    """
    del b1  # mathematically cancelled by BN mean subtraction (train mode)
    B, in_dim = x.shape
    hidden = w1.shape[1]
    out_dim = w2.shape[1]

    splits = max(1, int(num_core_splits))
    assert hidden % splits == 0, "hidden_dim must be divisible by num_core_splits"
    per_split = hidden // splits
    if tile_h is None:
        tile_h = _pick_tile_h(per_split)
    assert per_split % tile_h == 0, "hidden_dim/num_core_splits must be divisible by tile_h"
    tiles_per_split = per_split // tile_h

    def hid_idx(c, t):
        return c * tiles_per_split + t

    # Optional deeper buffering of the streamed weight tiles (v5e exposed-DMA case).
    w_mode = {} if weight_buffers == 2 else {"pipeline_mode": pl.Buffered(int(weight_buffers))}

    grid_spec = pltpu.PrefetchScalarGridSpec(
        num_scalar_prefetch=0,
        grid=(splits, tiles_per_split),
        in_specs=[
            # x: VMEM-resident, constant index -> single buffer (saves B*in_dim bytes)
            pl.BlockSpec((B, in_dim), lambda c, t: (0, 0),
                         pipeline_mode=pl.Buffered(1)),
            pl.BlockSpec((in_dim, tile_h), lambda c, t: (0, hid_idx(c, t)), **w_mode),
            pl.BlockSpec((1, tile_h), lambda c, t: (0, hid_idx(c, t))),      # gamma
            pl.BlockSpec((1, tile_h), lambda c, t: (0, hid_idx(c, t))),      # beta
            pl.BlockSpec((tile_h, out_dim), lambda c, t: (hid_idx(c, t), 0), **w_mode),
            # b2: tiny, constant index -> single buffer
            pl.BlockSpec((1, out_dim), lambda c, t: (0, 0),
                         pipeline_mode=pl.Buffered(1)),
        ],
        # one resident f32 partial per core-split; constant across the reduction axis
        out_specs=pl.BlockSpec((None, B, out_dim), lambda c, t: (c, 0, 0)),
    )

    partials = pl.pallas_call(
        mlp_kernel,
        out_shape=jax.ShapeDtypeStruct((splits, B, out_dim), jnp.float32),
        grid_spec=grid_spec,
        compiler_params=pltpu.CompilerParams(
            dimension_semantics=("parallel", "arbitrary"),
            vmem_limit_bytes=_vmem_limit_bytes(),
        ),
    )(x, w1, gamma, beta, w2, b2)

    out = partials[0] if splits == 1 else jnp.sum(partials, axis=0)
    return out if x.dtype == jnp.float32 else out.astype(x.dtype)


def init_params(key, in_dim, hidden_dim, out_dim, *, compute_dtype=jnp.bfloat16):
    """PyTorch nn.Linear-style init; matmul weights stored persistently in bf16
    (fan_in, fan_out) so no per-call casts are needed."""
    k1, k2, k3, k4 = jax.random.split(key, 4)
    bound1 = 1.0 / jnp.sqrt(in_dim)
    bound2 = 1.0 / jnp.sqrt(hidden_dim)
    w1 = jax.random.uniform(k1, (in_dim, hidden_dim), jnp.float32,
                            -bound1, bound1).astype(compute_dtype)
    b1 = jax.random.uniform(k2, (1, hidden_dim), jnp.float32, -bound1, bound1)
    w2 = jax.random.uniform(k3, (hidden_dim, out_dim), jnp.float32,
                            -bound2, bound2).astype(compute_dtype)
    b2 = jax.random.uniform(k4, (1, out_dim), jnp.float32, -bound2, bound2)
    # BatchNorm1d affine params at PyTorch defaults: gamma=1, beta=0
    gamma = jnp.ones((1, hidden_dim), jnp.float32)
    beta = jnp.zeros((1, hidden_dim), jnp.float32)
    return w1, b1, gamma, beta, w2, b2


def reference(x, w1, b1, gamma, beta, w2, b2):
    """Pure-JAX f32 reference matching the PyTorch module (train-mode BN)."""
    x = x.astype(jnp.float32)
    h = x @ w1.astype(jnp.float32) + b1
    mean = jnp.mean(h, axis=0, keepdims=True)
    var = jnp.mean((h - mean) ** 2, axis=0, keepdims=True)
    h = (h - mean) * jax.lax.rsqrt(var + BN_EPS) * gamma + beta
    h = jnp.maximum(h, 0.0)
    return h @ w2.astype(jnp.float32) + b2


if __name__ == "__main__":
    # small, lane/MXU-aligned demo shapes (feature axes multiples of 128)
    B, IN_DIM, HIDDEN_DIM, OUT_DIM = 16, 128, 512, 128

    key = jax.random.PRNGKey(0)
    k_x, k_p = jax.random.split(key)
    x = jax.random.normal(k_x, (B, IN_DIM), jnp.float32)
    params = init_params(k_p, IN_DIM, HIDDEN_DIM, OUT_DIM)

    # tile_h=128, num_core_splits=2 -> grid (2, 2): exercises both the dual-core
    # partial-sum path and the multi-step hidden accumulation path.
    out = byol_mlp(x, *params, tile_h=128, num_core_splits=2)
    jax.block_until_ready(out)

    ref = reference(x, *params)
    assert out.shape == (B, OUT_DIM)
    assert out.dtype == x.dtype
    # bf16 matmul operands -> compare with bf16-appropriate tolerance
    assert jnp.allclose(out, ref, atol=5e-2, rtol=5e-2), "mismatch vs JAX reference"

    print("KERNEL_OK")
</pallas_src>

<mosaic_0001>
module attributes {stable_mosaic.version = 11 : i64} {
  func.func @mlp_kernel(%arg0: i32, %arg1: i32, %arg2: memref<16x128xf32, #tpu.memory_space<vmem>>, %arg3: memref<128x128xbf16, #tpu.memory_space<vmem>>, %arg4: memref<1x128xf32, #tpu.memory_space<vmem>>, %arg5: memref<1x128xf32, #tpu.memory_space<vmem>>, %arg6: memref<128x128xbf16, #tpu.memory_space<vmem>>, %arg7: memref<1x128xf32, #tpu.memory_space<vmem>>, %arg8: memref<1x16x128xf32, #tpu.memory_space<vmem>>) attributes {dimension_semantics = [#tpu.dimension_semantics<parallel>, #tpu.dimension_semantics<arbitrary>], iteration_bounds = array<i64: 2, 2>, scalar_prefetch = 0 : i64, scratch_operands = 0 : i64, tpu.core_type = #tpu.core_type<tc>, window_params = [{pipeline_mode = #tpu.pipeline_mode<synchronous>, transform_indices = @transform_0, window_bounds = array<i64: 16, 128>}, {transform_indices = @transform_1, window_bounds = array<i64: 128, 128>}, {transform_indices = @transform_2, window_bounds = array<i64: 1, 128>}, {transform_indices = @transform_3, window_bounds = array<i64: 1, 128>}, {transform_indices = @transform_4, window_bounds = array<i64: 128, 128>}, {pipeline_mode = #tpu.pipeline_mode<synchronous>, transform_indices = @transform_5, window_bounds = array<i64: 1, 128>}, {transform_indices = @transform_6, window_bounds = array<i64: 1, 16, 128>}]} {
    %c0_i32 = arith.constant 0 : i32
    %0 = arith.cmpi eq, %arg1, %c0_i32 : i32
    %1 = arith.extui %0 : i1 to i32
    %c0_i32_0 = arith.constant 0 : i32
    %2 = arith.cmpi ne, %1, %c0_i32_0 : i32
    scf.if %2 {
      %c0_24 = arith.constant 0 : index
      %c0_25 = arith.constant 0 : index
      %43 = vector.load %arg7[%c0_24, %c0_25] : memref<1x128xf32, #tpu.memory_space<vmem>>, vector<1x128xf32>
      %c0_i32_26 = arith.constant 0 : i32
      %44 = arith.cmpi eq, %arg0, %c0_i32_26 : i32
      %cst_27 = arith.constant 0.000000e+00 : f32
      %45 = vector.broadcast %cst_27 : f32 to vector<1x128xf32>
      %46 = arith.select %44, %43, %45 : vector<1x128xf32>
      %47 = vector.shape_cast %46 : vector<1x128xf32> to vector<1x128xf32>
      %48 = vector.broadcast %47 : vector<1x128xf32> to vector<16x128xf32>
      %c0_28 = arith.constant 0 : index
      %c0_29 = arith.constant 0 : index
      %c0_30 = arith.constant 0 : index
      %49 = vector.load %arg8[%c0_28, %c0_29, %c0_30] : memref<1x16x128xf32, #tpu.memory_space<vmem>>, vector<1x16x128xf32>
      %50 = vector.shape_cast %49 : vector<1x16x128xf32> to vector<16x128xf32>
      %51 = vector.shape_cast %48 : vector<16x128xf32> to vector<1x16x128xf32>
      tpu.vector_store %arg8[%c0_28, %c0_29, %c0_30], %51 {strides = array<i32>} : memref<1x16x128xf32, #tpu.memory_space<vmem>>, vector<1x16x128xf32>,
    } else {
    }
    %c0 = arith.constant 0 : index
    %c0_1 = arith.constant 0 : index
    %3 = vector.load %arg2[%c0, %c0_1] : memref<16x128xf32, #tpu.memory_space<vmem>>, vector<16x128xf32>
    %4 = arith.truncf %3 : vector<16x128xf32> to vector<16x128xbf16>
    %c0_2 = arith.constant 0 : index
    %c0_3 = arith.constant 0 : index
    %5 = vector.load %arg3[%c0_2, %c0_3] : memref<128x128xbf16, #tpu.memory_space<vmem>>, vector<128x128xbf16>
    %cst = arith.constant dense<0.000000e+00> : vector<16x128xf32>
    %6 = tpu.matmul %4, %5, %cst {dimension_numbers = #tpu.dot_dimension_numbers<[1], [0], [0], [1], [0, 0, 1, 1], [], []>} : vector<16x128xbf16>, vector<128x128xbf16>, vector<16x128xf32> -> vector<16x128xf32>
    %cst_4 = arith.constant dense<0.000000e+00> : vector<128xf32>
    %7 = vector.multi_reduction <add>, %6, %cst_4 [0] : vector<16x128xf32> to vector<128xf32>
    %8 = vector.shape_cast %7 : vector<128xf32> to vector<1x128xf32>
    %9 = arith.mulf %6, %6 : vector<16x128xf32>
    %cst_5 = arith.constant dense<0.000000e+00> : vector<128xf32>
    %10 = vector.multi_reduction <add>, %9, %cst_5 [0] : vector<16x128xf32> to vector<128xf32>
    %11 = vector.shape_cast %10 : vector<128xf32> to vector<1x128xf32>
    %cst_6 = arith.constant 6.250000e-02 : f32
    %12 = vector.broadcast %cst_6 : f32 to vector<1x128xf32>
    %13 = arith.mulf %8, %12 : vector<1x128xf32>
    %cst_7 = arith.constant 6.250000e-02 : f32
    %14 = vector.broadcast %cst_7 : f32 to vector<1x128xf32>
    %15 = arith.mulf %11, %14 : vector<1x128xf32>
    %16 = arith.mulf %13, %13 : vector<1x128xf32>
    %17 = arith.subf %15, %16 : vector<1x128xf32>
    %cst_8 = arith.constant 0.000000e+00 : f32
    %18 = vector.broadcast %cst_8 : f32 to vector<1x128xf32>
    %19 = arith.maximumf %17, %18 : vector<1x128xf32>
    %c0_9 = arith.constant 0 : index
    %c0_10 = arith.constant 0 : index
    %20 = vector.load %arg4[%c0_9, %c0_10] : memref<1x128xf32, #tpu.memory_space<vmem>>, vector<1x128xf32>
    %cst_11 = arith.constant 9.99999974E-6 : f32
    %21 = vector.broadcast %cst_11 : f32 to vector<1x128xf32>
    %22 = arith.addf %19, %21 : vector<1x128xf32>
    %23 = math.rsqrt %22 : vector<1x128xf32>
    %24 = arith.mulf %20, %23 : vector<1x128xf32>
    %c0_12 = arith.constant 0 : index
    %c0_13 = arith.constant 0 : index
    %25 = vector.load %arg5[%c0_12, %c0_13] : memref<1x128xf32, #tpu.memory_space<vmem>>, vector<1x128xf32>
    %26 = arith.mulf %13, %24 : vector<1x128xf32>
    %27 = arith.subf %25, %26 : vector<1x128xf32>
    %28 = vector.broadcast %24 : vector<1x128xf32> to vector<16x128xf32>
    %29 = arith.mulf %6, %28 : vector<16x128xf32>
    %30 = vector.broadcast %27 : vector<1x128xf32> to vector<16x128xf32>
    %31 = arith.addf %29, %30 : vector<16x128xf32>
    %cst_14 = arith.constant 0.000000e+00 : f32
    %32 = vector.broadcast %cst_14 : f32 to vector<16x128xf32>
    %33 = arith.maximumf %31, %32 : vector<16x128xf32>
    %c0_15 = arith.constant 0 : index
    %c0_16 = arith.constant 0 : index
    %c0_17 = arith.constant 0 : index
    %34 = vector.load %arg8[%c0_15, %c0_16, %c0_17] : memref<1x16x128xf32, #tpu.memory_space<vmem>>, vector<1x16x128xf32>
    %35 = vector.shape_cast %34 : vector<1x16x128xf32> to vector<16x128xf32>
    %36 = arith.truncf %33 : vector<16x128xf32> to vector<16x128xbf16>
    %c0_18 = arith.constant 0 : index
    %c0_19 = arith.constant 0 : index
    %37 = vector.load %arg6[%c0_18, %c0_19] : memref<128x128xbf16, #tpu.memory_space<vmem>>, vector<128x128xbf16>
    %cst_20 = arith.constant dense<0.000000e+00> : vector<16x128xf32>
    %38 = tpu.matmul %36, %37, %cst_20 {dimension_numbers = #tpu.dot_dimension_numbers<[1], [0], [0], [1], [0, 0, 1, 1], [], []>} : vector<16x128xbf16>, vector<128x128xbf16>, vector<16x128xf32> -> vector<16x128xf32>
    %39 = arith.addf %35, %38 : vector<16x128xf32>
    %c0_21 = arith.constant 0 : index
    %c0_22 = arith.constant 0 : index
    %c0_23 = arith.constant 0 : index
    %40 = vector.load %arg8[%c0_21, %c0_22, %c0_23] : memref<1x16x128xf32, #tpu.memory_space<vmem>>, vector<1x16x128xf32>
    %41 = vector.shape_cast %40 : vector<1x16x128xf32> to vector<16x128xf32>
    %42 = vector.shape_cast %39 : vector<16x128xf32> to vector<1x16x128xf32>
    tpu.vector_store %arg8[%c0_21, %c0_22, %c0_23], %42 {strides = array<i32>} : memref<1x16x128xf32, #tpu.memory_space<vmem>>, vector<1x16x128xf32>,
    return
  }
  func.func @transform_0(%arg0: i32, %arg1: i32) -> (i32, i32) {
    %c0_i32 = arith.constant 0 : i32
    %c0_i32_0 = arith.constant 0 : i32
    %c0_i32_1 = arith.constant 0 : i32
    return %c0_i32, %c0_i32_0 : i32, i32
  }
  func.func @transform_1(%arg0: i32, %arg1: i32) -> (i32, i32) {
    %c2_i32 = arith.constant 2 : i32
    %0 = arith.muli %arg0, %c2_i32 : i32
    %1 = arith.addi %0, %arg1 : i32
    %c0_i32 = arith.constant 0 : i32
    %c0_i32_0 = arith.constant 0 : i32
    return %c0_i32, %1 : i32, i32
  }
  func.func @transform_2(%arg0: i32, %arg1: i32) -> (i32, i32) {
    %c2_i32 = arith.constant 2 : i32
    %0 = arith.muli %arg0, %c2_i32 : i32
    %1 = arith.addi %0, %arg1 : i32
    %c0_i32 = arith.constant 0 : i32
    %c0_i32_0 = arith.constant 0 : i32
    return %c0_i32, %1 : i32, i32
  }
  func.func @transform_3(%arg0: i32, %arg1: i32) -> (i32, i32) {
    %c2_i32 = arith.constant 2 : i32
    %0 = arith.muli %arg0, %c2_i32 : i32
    %1 = arith.addi %0, %arg1 : i32
    %c0_i32 = arith.constant 0 : i32
    %c0_i32_0 = arith.constant 0 : i32
    return %c0_i32, %1 : i32, i32
  }
  func.func @transform_4(%arg0: i32, %arg1: i32) -> (i32, i32) {
    %c2_i32 = arith.constant 2 : i32
    %0 = arith.muli %arg0, %c2_i32 : i32
    %1 = arith.addi %0, %arg1 : i32
    %c0_i32 = arith.constant 0 : i32
    %c0_i32_0 = arith.constant 0 : i32
    return %1, %c0_i32 : i32, i32
  }
  func.func @transform_5(%arg0: i32, %arg1: i32) -> (i32, i32) {
    %c0_i32 = arith.constant 0 : i32
    %c0_i32_0 = arith.constant 0 : i32
    %c0_i32_1 = arith.constant 0 : i32
    return %c0_i32, %c0_i32_0 : i32, i32
  }
  func.func @transform_6(%arg0: i32, %arg1: i32) -> (i32, i32, i32) {
    %c0_i32 = arith.constant 0 : i32
    %c0_i32_0 = arith.constant 0 : i32
    %c0_i32_1 = arith.constant 0 : i32
    return %arg0, %c0_i32, %c0_i32_0 : i32, i32, i32
  }
}

</mosaic_0001>

<llo_original>
// kernel: tpu_custom_call.1
$region0: #{tpu_custom_call.1}
  #allocation0 [shape = 'u32[]', space=smem, size = 0x4, offset = 0x4, fixed_abs, tag = 'smem constant byte address 0x4 - core index']
  #allocation1 [shape = 'u32[72,128]{1,0:T(1,128)}', space=vmem, size = 0x9000, scoped, tag = 'internal scratch']
  %s0 = inlined_call_operand.hbm [shape: f32[16,128], index: 0, kind: input, shape index: {}]
  %s1 = inlined_call_operand.hbm [shape: bf16[128,512], index: 1, kind: input, shape index: {}]
  %s2 = inlined_call_operand.hbm [shape: f32[1,512], index: 2, kind: input, shape index: {}]
  %s3 = inlined_call_operand.hbm [shape: f32[1,512], index: 3, kind: input, shape index: {}]
  %s4 = inlined_call_operand.hbm [shape: bf16[512,128], index: 4, kind: input, shape index: {}]
  %s5 = inlined_call_operand.vmem [shape: f32[1,128], index: 5, kind: input, shape index: {}]
  %s6 = inlined_call_operand.hbm [shape: f32[2,16,128], index: 6, kind: output, shape index: {}]
  %s7 = sld [smem:[#allocation0]]
  $region81: #{tpu_custom_call.1} parent=0
    _
  %s9 = ssub.s32 1, %s7
  %s10 = scalar_select 0, %s9, %s7
  $region1: #{tpu_custom_call.1} parent=0
    #allocation2 [shape = 'u8[8192]{0}', space=vmem, size = 0x2000, scoped, tag = 'input window, operand 0, single buffered']
    #allocation3 [shape = 's32[2]{0}', space=sflag, size = 0x8, scoped, tag = 'scoped memory for tpu_custom_call.1']
    #allocation4 [shape = 's32[2]{0}', space=sflag, size = 0x8, scoped, tag = 'scoped memory for tpu_custom_call.1']
    #allocation5 [shape = 'u8[65536]{0}', space=vmem, size = 0x10000, scoped, tag = 'input window, operand 1']
    #allocation6 [shape = 's32[2]{0}', space=sflag, size = 0x8, scoped, tag = 'scoped memory for tpu_custom_call.1']
    #allocation7 [shape = 'u8[1024]{0}', space=vmem, size = 0x400, scoped, tag = 'input window, operand 2']
    #allocation8 [shape = 'u8[1024]{0}', space=vmem, size = 0x400, scoped, tag = 'input window, operand 3']
    #allocation9 [shape = 's32[2]{0}', space=sflag, size = 0x8, scoped, tag = 'scoped memory for tpu_custom_call.1']
    #allocation10 [shape = 'u8[65536]{0}', space=vmem, size = 0x10000, scoped, tag = 'input window, operand 4']
    #allocation11 [shape = 'u8[16384]{0}', space=vmem, size = 0x4000, scoped, tag = 'output window, operand 0']
    %11 = vsyncpa [#allocation3], 0
    %12 = vsyncpa [#allocation6], 0
    %s13 = scalar_lea.sflag [#allocation6], 1
    %14 = vsyncpa %s13, 0
    %15 = vsyncpa [#allocation9], 0
    %s16 = scalar_lea.sflag [#allocation9], 1
    %17 = vsyncpa %s16, 0
    %18 = vsyncpa [#allocation4], 0
    %s19 = scalar_lea.sflag [#allocation4], 1
    %20 = vsyncpa %s19, 0
    loop: start=0, step=1, limit=6
    $region2: #{tpu_custom_call.1} parent=1 // loop_pre_header
      _
    $region3: #{tpu_custom_call.1} parent=1 // loop_header
      %s22 = sphi 0, %s26
      %p23 = scmp.ge.s32.totalorder %s22, 6
      %s29 = sphi 0, %s41
      %s30 = sphi 0, %s37
      %s31 = sphi 0, %s29
      %s32 = sphi 0, %s30
      %s33 = sphi 0, %s31
      %s34 = sphi 0, %s32
      %s42 = sphi 0, %s42
      %s44 = sphi 0, %s42
      %s45 = sphi 0, %s44
      %s59 = sphi 0, %s45
      %s69 = sphi 0, %s71
      %s72 = sphi 0, %s69
      %s73 = sphi 0, %s72
      %s89 = sphi 0, %s73
      %s99 = sphi 0, %s101
      %s102 = sphi 0, %s99
      %s103 = sphi 0, %s102
      %s119 = sphi 0, %s103
      %s129 = sphi 0, %s131
      %s132 = sphi 0, %s129
      %s133 = sphi 0, %s132
      %s149 = sphi 0, %s133
      %s159 = sphi 0, %s161
      %s162 = sphi 0, %s159
      %s163 = sphi 0, %s162
      %s179 = sphi 0, %s163
      %s183 = sphi 0, %s183
      %s185 = sphi 0, %s183
      %s186 = sphi 0, %s185
      %s200 = sphi 0, %s186
      %s206 = sphi 0, %s208
      %s209 = sphi 0, %s206
      %s210 = sphi 0, %s209
      %s226 = sphi 0, %s210
    $region4: #{tpu_custom_call.1} parent=1 // loop_header_branch
      %25 = sbr.rel (%p23) target = $region8
    $region5: #{tpu_custom_call.1} parent=1 // loop_body
      %s27 = ssub.s32 %s22, 1
      %s28 = ssub.s32 %s22, 2
      %s35 = sadd.s32 1, %s30
      %p36 = scmp.ge.s32.totalorder %s35, 2
      %s37 = scalar_select %p36, 0, %s35
      %s38 = sadd.s32 1, %s29
      %s39 = scalar_select %p36, %s38, %s29
      %p40 = scmp.ge.s32.totalorder %s39, 2
      %s41 = scalar_select %p40, 0, %s39
      %s43 = sadd.s32 %s42, 1
      %p46 = scmp.eq.s32.totalorder %s22, 3
      %p47 = scmp.ne.s32.totalorder %s42, %s44
      %p48 = scmp.eq.s32.totalorder %s22, 0
      %p49 = por %p47, %p48
      %p50 = scmp.ne.s32.totalorder %s42, %s44
      %p51 = scmp.eq.s32.totalorder %s27, 3
      %p52 = por %p50, %p51
      %p53 = scmp.ne.s32.totalorder %s44, %s45
      %p54 = scmp.eq.s32.totalorder %s27, 0
      %p55 = por %p53, %p54
      %p56 = scmp.ne.s32.totalorder %s44, %s45
      %p57 = scmp.eq.s32.totalorder %s28, 3
      %p58 = por %p56, %p57
      %p60 = scmp.ne.s32.totalorder %s45, %s59
      %p61 = scmp.eq.s32.totalorder %s28, 0
      %p62 = por %p60, %p61
      %s63 = smul.u32 %s29, 2
      %s64 = sadd.s32 %s63, %s30
      %s65 = smul.u32 %s41, 2
      %s66 = sadd.s32 %s65, %s37
      %s67 = ssub.s32 %s64, %s66
      %p68 = scmp.eq.s32.totalorder %s67, 0
      %s70 = sadd.s32 %s69, 1
      %s71 = scalar_select %p68, %s69, %s70
      %p74 = pneg %p68
      %p75 = scmp.eq.s32.totalorder %s22, 3
      %p76 = por %p74, %p75
      %p77 = scmp.ne.s32.totalorder %s69, %s72
      %p78 = scmp.eq.s32.totalorder %s22, 0
      %p79 = por %p77, %p78
      %p80 = scmp.ne.s32.totalorder %s69, %s72
      %p81 = scmp.eq.s32.totalorder %s27, 3
      %p82 = por %p80, %p81
      %p83 = scmp.ne.s32.totalorder %s72, %s73
      %p84 = scmp.eq.s32.totalorder %s27, 0
      %p85 = por %p83, %p84
      %p86 = scmp.ne.s32.totalorder %s72, %s73
      %p87 = scmp.eq.s32.totalorder %s28, 3
      %p88 = por %p86, %p87
      %p90 = scmp.ne.s32.totalorder %s73, %s89
      %p91 = scmp.eq.s32.totalorder %s28, 0
      %p92 = por %p90, %p91
      %s93 = smul.u32 %s29, 2
      %s94 = sadd.s32 %s93, %s30
      %s95 = smul.u32 %s41, 2
      %s96 = sadd.s32 %s95, %s37
      %s97 = ssub.s32 %s94, %s96
      %p98 = scmp.eq.s32.totalorder %s97, 0
      %s100 = sadd.s32 %s99, 1
      %s101 = scalar_select %p98, %s99, %s100
      %p104 = pneg %p98
      %p105 = scmp.eq.s32.totalorder %s22, 3
      %p106 = por %p104, %p105
      %p107 = scmp.ne.s32.totalorder %s99, %s102
      %p108 = scmp.eq.s32.totalorder %s22, 0
      %p109 = por %p107, %p108
      %p110 = scmp.ne.s32.totalorder %s99, %s102
      %p111 = scmp.eq.s32.totalorder %s27, 3
      %p112 = por %p110, %p111
      %p113 = scmp.ne.s32.totalorder %s102, %s103
      %p114 = scmp.eq.s32.totalorder %s27, 0
      %p115 = por %p113, %p114
      %p116 = scmp.ne.s32.totalorder %s102, %s103
      %p117 = scmp.eq.s32.totalorder %s28, 3
      %p118 = por %p116, %p117
      %p120 = scmp.ne.s32.totalorder %s103, %s119
      %p121 = scmp.eq.s32.totalorder %s28, 0
      %p122 = por %p120, %p121
      %s123 = smul.u32 %s29, 2
      %s124 = sadd.s32 %s123, %s30
      %s125 = smul.u32 %s41, 2
      %s126 = sadd.s32 %s125, %s37
      %s127 = ssub.s32 %s124, %s126
      %p128 = scmp.eq.s32.totalorder %s127, 0
      %s130 = sadd.s32 %s129, 1
      %s131 = scalar_select %p128, %s129, %s130
      %p134 = pneg %p128
      %p135 = scmp.eq.s32.totalorder %s22, 3
      %p136 = por %p134, %p135
      %p137 = scmp.ne.s32.totalorder %s129, %s132
      %p138 = scmp.eq.s32.totalorder %s22, 0
      %p139 = por %p137, %p138
      %p140 = scmp.ne.s32.totalorder %s129, %s132
      %p141 = scmp.eq.s32.totalorder %s27, 3
      %p142 = por %p140, %p141
      %p143 = scmp.ne.s32.totalorder %s132, %s133
      %p144 = scmp.eq.s32.totalorder %s27, 0
      %p145 = por %p143, %p144
      %p146 = scmp.ne.s32.totalorder %s132, %s133
      %p147 = scmp.eq.s32.totalorder %s28, 3
      %p148 = por %p146, %p147
      %p150 = scmp.ne.s32.totalorder %s133, %s149
      %p151 = scmp.eq.s32.totalorder %s28, 0
      %p152 = por %p150, %p151
      %s153 = smul.u32 %s29, 2
      %s154 = sadd.s32 %s153, %s30
      %s155 = smul.u32 %s41, 2
      %s156 = sadd.s32 %s155, %s37
      %s157 = ssub.s32 %s154, %s156
      %p158 = scmp.eq.s32.totalorder %s157, 0
      %s160 = sadd.s32 %s159, 1
      %s161 = scalar_select %p158, %s159, %s160
      %p164 = pneg %p158
      %p165 = scmp.eq.s32.totalorder %s22, 3
      %p166 = por %p164, %p165
      %p167 = scmp.ne.s32.totalorder %s159, %s162
      %p168 = scmp.eq.s32.totalorder %s22, 0
      %p169 = por %p167, %p168
      %p170 = scmp.ne.s32.totalorder %s159, %s162
      %p171 = scmp.eq.s32.totalorder %s27, 3
      %p172 = por %p170, %p171
      %p173 = scmp.ne.s32.totalorder %s162, %s163
      %p174 = scmp.eq.s32.totalorder %s27, 0
      %p175 = por %p173, %p174
      %p176 = scmp.ne.s32.totalorder %s162, %s163
      %p177 = scmp.eq.s32.totalorder %s28, 3
      %p178 = por %p176, %p177
      %p180 = scmp.ne.s32.totalorder %s163, %s179
      %p181 = scmp.eq.s32.totalorder %s28, 0
      %p182 = por %p180, %p181
      %s184 = sadd.s32 %s183, 1
      %p187 = scmp.eq.s32.totalorder %s22, 3
      %p188 = scmp.ne.s32.totalorder %s183, %s185
      %p189 = scmp.eq.s32.totalorder %s22, 0
      %p190 = por %p188, %p189
      %p191 = scmp.ne.s32.totalorder %s183, %s185
      %p192 = scmp.eq.s32.totalorder %s27, 3
      %p193 = por %p191, %p192
      %p194 = scmp.ne.s32.totalorder %s185, %s186
      %p195 = scmp.eq.s32.totalorder %s27, 0
      %p196 = por %p194, %p195
      %p197 = scmp.ne.s32.totalorder %s185, %s186
      %p198 = scmp.eq.s32.totalorder %s28, 3
      %p199 = por %p197, %p198
      %p201 = scmp.ne.s32.totalorder %s186, %s200
      %p202 = scmp.eq.s32.totalorder %s28, 0
      %p203 = por %p201, %p202
      %s204 = ssub.s32 %s29, %s41
      %p205 = scmp.eq.s32.totalorder %s204, 0
      %s207 = sadd.s32 %s206, 1
      %s208 = scalar_select %p205, %s206, %s207
      %p211 = pneg %p205
      %p212 = scmp.eq.s32.totalorder %s22, 3
      %p213 = por %p211, %p212
      %p214 = scmp.ne.s32.totalorder %s206, %s209
      %p215 = scmp.eq.s32.totalorder %s22, 0
      %p216 = por %p214, %p215
      %p217 = scmp.ne.s32.totalorder %s206, %s209
      %p218 = scmp.eq.s32.totalorder %s27, 3
      %p219 = por %p217, %p218
      %p220 = scmp.ne.s32.totalorder %s209, %s210
      %p221 = scmp.eq.s32.totalorder %s27, 0
      %p222 = por %p220, %p221
      %p223 = scmp.ne.s32.totalorder %s209, %s210
      %p224 = scmp.eq.s32.totalorder %s28, 3
      %p225 = por %p223, %p224
      %p227 = scmp.ne.s32.totalorder %s210, %s226
      %p228 = scmp.eq.s32.totalorder %s28, 0
      %p229 = por %p227, %p228
      %p230 = scmp.le.s32.totalorder 1, %s22
      %p231 = scmp.lt.s32.totalorder %s22, 5
      %p232 = pnand %p230, %p231
      %p233 = pneg %p232
      // Predicated region
      $region9: #{tpu_custom_call.1} parent=5 // pred_check
        _
      $region10: #{tpu_custom_call.1} parent=5 // pred_check_branch
        %235 = sbr.rel (%p232) target = $region12
      $region11: #{tpu_custom_call.1} parent=5 // pred_region
        %s236 = ssub.s32 %s22, 1
        // Predicated region
        $region13: #{tpu_custom_call.1} parent=11 // pred_check
          %p237 = pneg %p55
        $region14: #{tpu_custom_call.1} parent=11 // pred_check_branch
          %239 = sbr.rel (%p237) target = $region16
        $region15: #{tpu_custom_call.1} parent=11 // pred_region
          %241 = vsyncadd [#allocation3], 0
          %s242 = sshll.u32 %s0, 4
          %s243 = int_to_ptr.hbm [resolvable:$true] %s242
          %s244 = sshll.u32 [#allocation2], 4
          %s245 = int_to_ptr.vmem [resolvable:$true] %s244
          %250 = dma.hbm_to_vmem [thread:$0]  %s243, 256, %s245, [#allocation3], 128, 128, 8
        $region16: #{tpu_custom_call.1} parent=11 // pred_fallthru
          _
        // Predicated region
        $region17: #{tpu_custom_call.1} parent=11 // pred_check
          %p251 = pneg %p196
        $region18: #{tpu_custom_call.1} parent=11 // pred_check_branch
          %253 = sbr.rel (%p251) target = $region20
        $region19: #{tpu_custom_call.1} parent=11 // pred_region
          _
        $region20: #{tpu_custom_call.1} parent=11 // pred_fallthru
          _
      $region12: #{tpu_custom_call.1} parent=5 // pred_fallthru
        _
      %p254 = scmp.lt.s32.totalorder %s22, 4
      // Predicated region
      $region21: #{tpu_custom_call.1} parent=5 // pred_check
        %p255 = pneg %p254
      $region22: #{tpu_custom_call.1} parent=5 // pred_check_branch
        %257 = sbr.rel (%p255) target = $region24
      $region23: #{tpu_custom_call.1} parent=5 // pred_region
        // Predicated region
        $region25: #{tpu_custom_call.1} parent=23 // pred_check
          %p258 = pneg %p79
        $region26: #{tpu_custom_call.1} parent=23 // pred_check_branch
          %260 = sbr.rel (%p258) target = $region28
        $region27: #{tpu_custom_call.1} parent=23 // pred_region
          %s261 = sand.u32 %s22, 1
          %s262 = scalar_lea.sflag [#allocation6], %s261
          %s263 = sand.u32 %s69, 1
          %s264 = smul.addr %s263, 64
          %s265 = scalar_lea.vmem [#allocation5], %s264
          %s266 = smul.u32 %s29, 2
          %s267 = sadd.s32 %s266, %s30
          %269 = vsyncadd %s262, 0
          %s270 = smul.addr %s267, 4
          %s271 = scalar_lea.hbm %s1, %s270
          %s272 = sshll.u32 %s271, 4
          %s273 = int_to_ptr.hbm [resolvable:$true] %s272
          %s274 = sshll.u32 %s265, 4
          %s275 = int_to_ptr.vmem [resolvable:$true] %s274
          %280 = dma.hbm_to_vmem [thread:$0]  %s273, 1024, %s275, %s262, 256, 64, 4
        $region28: #{tpu_custom_call.1} parent=23 // pred_fallthru
          _
        // Predicated region
        $region29: #{tpu_custom_call.1} parent=23 // pred_check
          %p281 = pneg %p109
        $region30: #{tpu_custom_call.1} parent=23 // pred_check_branch
          %283 = sbr.rel (%p281) target = $region32
        $region31: #{tpu_custom_call.1} parent=23 // pred_region
          %s284 = sand.u32 %s22, 1
          %s285 = scalar_lea.sflag [#allocation6], %s284
          %s286 = sand.u32 %s99, 1
          %s287 = scalar_lea.vmem [#allocation7], %s286
          %s288 = smul.u32 %s29, 2
          %s289 = sadd.s32 %s288, %s30
          %291 = vsyncadd %s285, 0
          %s292 = scalar_lea.hbm %s2, %s289
          %s294 = sshll.u32 %s292, 4
          %s295 = int_to_ptr.hbm [resolvable:$true] %s294
          %s296 = sshll.u32 %s287, 4
          %s297 = int_to_ptr.vmem [resolvable:$true] %s296
          %299 = dma.hbm_to_vmem [thread:$0]  %s295, 16, %s297, %s285
        $region32: #{tpu_custom_call.1} parent=23 // pred_fallthru
          _
        // Predicated region
        $region33: #{tpu_custom_call.1} parent=23 // pred_check
          %p300 = pneg %p139
        $region34: #{tpu_custom_call.1} parent=23 // pred_check_branch
          %302 = sbr.rel (%p300) target = $region36
        $region35: #{tpu_custom_call.1} parent=23 // pred_region
          %s303 = sand.u32 %s22, 1
          %s304 = scalar_lea.sflag [#allocation9], %s303
          %s305 = sand.u32 %s129, 1
          %s306 = scalar_lea.vmem [#allocation8], %s305
          %s307 = smul.u32 %s29, 2
          %s308 = sadd.s32 %s307, %s30
          %310 = vsyncadd %s304, 0
          %s311 = scalar_lea.hbm %s3, %s308
          %s313 = sshll.u32 %s311, 4
          %s314 = int_to_ptr.hbm [resolvable:$true] %s313
          %s315 = sshll.u32 %s306, 4
          %s316 = int_to_ptr.vmem [resolvable:$true] %s315
          %318 = dma.hbm_to_vmem [thread:$0]  %s314, 16, %s316, %s304
        $region36: #{tpu_custom_call.1} parent=23 // pred_fallthru
          _
        // Predicated region
        $region37: #{tpu_custom_call.1} parent=23 // pred_check
          %p319 = pneg %p169
        $region38: #{tpu_custom_call.1} parent=23 // pred_check_branch
          %321 = sbr.rel (%p319) target = $region40
        $region39: #{tpu_custom_call.1} parent=23 // pred_region
          %s322 = sand.u32 %s22, 1
          %s323 = scalar_lea.sflag [#allocation9], %s322
          %s324 = sand.u32 %s159, 1
          %s325 = smul.addr %s324, 64
          %s326 = scalar_lea.vmem [#allocation10], %s325
          %s327 = smul.u32 %s29, 2
          %s328 = sadd.s32 %s327, %s30
          %s329 = smul.u32 16, %s328
          %331 = vsyncadd %s323, 0
          %s332 = smul.addr %s329, 4
          %s333 = scalar_lea.hbm %s4, %s332
          %s334 = sshll.u32 %s333, 4
          %s335 = int_to_ptr.hbm [resolvable:$true] %s334
          %s336 = sshll.u32 %s326, 4
          %s337 = int_to_ptr.vmem [resolvable:$true] %s336
          %342 = dma.hbm_to_vmem [thread:$0]  %s335, 1024, %s337, %s323, 64, 64, 4
        $region40: #{tpu_custom_call.1} parent=23 // pred_fallthru
          _
      $region24: #{tpu_custom_call.1} parent=5 // pred_fallthru
        _
      %p343 = scmp.le.s32.totalorder 1, %s22
      %p344 = scmp.lt.s32.totalorder %s22, 5
      %p345 = pnand %p343, %p344
      %p346 = pneg %p345
      // Predicated region
      $region41: #{tpu_custom_call.1} parent=5 // pred_check
        _
      $region42: #{tpu_custom_call.1} parent=5 // pred_check_branch
        %348 = sbr.rel (%p345) target = $region44
      $region43: #{tpu_custom_call.1} parent=5 // pred_region
        %s349 = ssub.s32 %s22, 1
        // Predicated region
        $region45: #{tpu_custom_call.1} parent=43 // pred_check
          %p350 = pneg %p55
        $region46: #{tpu_custom_call.1} parent=43 // pred_check_branch
          %352 = sbr.rel (%p350) target = $region48
        $region47: #{tpu_custom_call.1} parent=43 // pred_region
          %354 = dma.done [#allocation3], 256
        $region48: #{tpu_custom_call.1} parent=43 // pred_fallthru
          _
        %s355 = sand.u32 %s27, 1
        %s356 = scalar_lea.sflag [#allocation6], %s355
        %s357 = sand.u32 %s72, 1
        %s358 = smul.addr %s357, 64
        %s359 = scalar_lea.vmem [#allocation5], %s358
        // Predicated region
        $region49: #{tpu_custom_call.1} parent=43 // pred_check
          %p360 = pneg %p85
        $region50: #{tpu_custom_call.1} parent=43 // pred_check_branch
          %362 = sbr.rel (%p360) target = $region52
        $region51: #{tpu_custom_call.1} parent=43 // pred_region
          %364 = dma.done %s356, 1024
        $region52: #{tpu_custom_call.1} parent=43 // pred_fallthru
          _
        %s365 = sand.u32 %s27, 1
        %s366 = scalar_lea.sflag [#allocation6], %s365
        %s367 = sand.u32 %s102, 1
        %s368 = scalar_lea.vmem [#allocation7], %s367
        // Predicated region
        $region53: #{tpu_custom_call.1} parent=43 // pred_check
          %p369 = pneg %p115
        $region54: #{tpu_custom_call.1} parent=43 // pred_check_branch
          %371 = sbr.rel (%p369) target = $region56
        $region55: #{tpu_custom_call.1} parent=43 // pred_region
          %373 = dma.done %s366, 16
        $region56: #{tpu_custom_call.1} parent=43 // pred_fallthru
          _
        %s374 = sand.u32 %s27, 1
        %s375 = scalar_lea.sflag [#allocation9], %s374
        %s376 = sand.u32 %s132, 1
        %s377 = scalar_lea.vmem [#allocation8], %s376
        // Predicated region
        $region57: #{tpu_custom_call.1} parent=43 // pred_check
          %p378 = pneg %p145
        $region58: #{tpu_custom_call.1} parent=43 // pred_check_branch
          %380 = sbr.rel (%p378) target = $region60
        $region59: #{tpu_custom_call.1} parent=43 // pred_region
          %382 = dma.done %s375, 16
        $region60: #{tpu_custom_call.1} parent=43 // pred_fallthru
          _
        %s383 = sand.u32 %s27, 1
        %s384 = scalar_lea.sflag [#allocation9], %s383
        %s385 = sand.u32 %s162, 1
        %s386 = smul.addr %s385, 64
        %s387 = scalar_lea.vmem [#allocation10], %s386
        // Predicated region
        $region61: #{tpu_custom_call.1} parent=43 // pred_check
          %p388 = pneg %p175
        $region62: #{tpu_custom_call.1} parent=43 // pred_check_branch
          %390 = sbr.rel (%p388) target = $region64
        $region63: #{tpu_custom_call.1} parent=43 // pred_region
          %392 = dma.done %s384, 1024
        $region64: #{tpu_custom_call.1} parent=43 // pred_fallthru
          _
        %p393 = pneg %p55
        %p394 = pneg %p52
        %s395 = sand.u32 %s27, 1
        %s396 = scalar_lea.sflag [#allocation6], %s395
        %s397 = sand.u32 %s72, 1
        %s398 = smul.addr %s397, 64
        %s399 = scalar_lea.vmem [#allocation5], %s398
        %p400 = pneg %p85
        %p401 = pneg %p82
        %s402 = sand.u32 %s27, 1
        %s403 = scalar_lea.sflag [#allocation6], %s402
        %s404 = sand.u32 %s102, 1
        %s405 = scalar_lea.vmem [#allocation7], %s404
        %p406 = pneg %p115
        %p407 = pneg %p112
        %s408 = sand.u32 %s27, 1
        %s409 = scalar_lea.sflag [#allocation9], %s408
        %s410 = sand.u32 %s132, 1
        %s411 = scalar_lea.vmem [#allocation8], %s410
        %p412 = pneg %p145
        %p413 = pneg %p142
        %s414 = sand.u32 %s27, 1
        %s415 = scalar_lea.sflag [#allocation9], %s414
        %s416 = sand.u32 %s162, 1
        %s417 = smul.addr %s416, 64
        %s418 = scalar_lea.vmem [#allocation10], %s417
        %p419 = pneg %p175
        %p420 = pneg %p172
        %p421 = pneg %p196
        %p422 = pneg %p193
        %p423 = pneg %p222
        %p424 = pneg %p219
        %s425 = sand.u32 %s209, 1
        %s426 = scalar_lea.sflag [#allocation4], %s425
        %s427 = sand.u32 %s209, 1
        %s428 = smul.addr %s427, 16
        %s429 = scalar_lea.vmem [#allocation11], %s428
        %s430 = smul.u32 %s31, 2
        %s431 = sadd.s32 %s430, %s32
        %s432 = smul.u32 %s31, 2
        %s433 = sadd.s32 %s432, %s32
        %s434 = smul.u32 %s31, 2
        %s435 = sadd.s32 %s434, %s32
        %s436 = smul.u32 %s31, 2
        %s437 = sadd.s32 %s436, %s32
        %s438 = smul.u32 16, %s437
        %p439 = scmp.eq.s32.totalorder %s32, 0
        // Predicated region
        $region65: #{tpu_custom_call.1} parent=43 // pred_check
          %p440 = pneg %p439
        $region66: #{tpu_custom_call.1} parent=43 // pred_check_branch
          %442 = sbr.rel (%p440) target = $region68
        $region67: #{tpu_custom_call.1} parent=43 // pred_region
          %v443 = vld [vmem:[%s5] sm:$0x1]
          %p444 = scmp.eq.s32.totalorder %s31, 0
          %s445 = scalar_select %p444, 1, 0
          %v446 = vstv %s445
          %vm447 = vcmp.eq.s32.totalorder %v446, 1
          %v448 = vsel %vm447, %v443, 0.0
          %v450 = vperm.slane %v448, 0
          %452 = vst [vmem:[%s429] sm:$0xff] %v450
          %453 = vst [vmem:[%s429 + $0x8] sm:$0xff] %v450
        $region68: #{tpu_custom_call.1} parent=43 // pred_fallthru
          _
        %v454 = vld [vmem:[#allocation2] sm:$0xff]
        %v455 = vld [vmem:[#allocation2 + $0x8] sm:$0xff]
        %v456 = vpack.c.bf16 %v455, %v454
        %v457 = vld [vmem:[%s359] sm:$0xf]
        %v458 = vld [vmem:[%s359 + $0x4] sm:$0xf]
        %v459 = vld [vmem:[%s359 + $0x8] sm:$0xf]
        %v460 = vld [vmem:[%s359 + $0xc] sm:$0xf]
        %v461 = vld [vmem:[%s359 + $0x10] sm:$0xf]
        %v462 = vld [vmem:[%s359 + $0x14] sm:$0xf]
        %v463 = vld [vmem:[%s359 + $0x18] sm:$0xf]
        %v464 = vld [vmem:[%s359 + $0x1c] sm:$0xf]
        %v465 = vld [vmem:[%s359 + $0x20] sm:$0xf]
        %v466 = vld [vmem:[%s359 + $0x24] sm:$0xf]
        %v467 = vld [vmem:[%s359 + $0x28] sm:$0xf]
        %v468 = vld [vmem:[%s359 + $0x2c] sm:$0xf]
        %v469 = vld [vmem:[%s359 + $0x30] sm:$0xf]
        %v470 = vld [vmem:[%s359 + $0x34] sm:$0xf]
        %v471 = vld [vmem:[%s359 + $0x38] sm:$0xf]
        %v472 = vld [vmem:[%s359 + $0x3c] sm:$0xf]
        %v489 = vunpack.c.l.b16 %v457
        %v490 = vunpack.c.l.b16 %v458
        %v491 = vunpack.c.l.b16 %v459
        %v492 = vunpack.c.l.b16 %v460
        %v493 = vunpack.c.l.b16 %v461
        %v494 = vunpack.c.l.b16 %v462
        %v495 = vunpack.c.l.b16 %v463
        %v496 = vunpack.c.l.b16 %v464
        %v497 = vunpack.c.l.b16 %v465
        %v498 = vunpack.c.l.b16 %v466
        %v499 = vunpack.c.l.b16 %v467
        %v500 = vunpack.c.l.b16 %v468
        %v501 = vunpack.c.l.b16 %v469
        %v502 = vunpack.c.l.b16 %v470
        %v503 = vunpack.c.l.b16 %v471
        %v504 = vunpack.c.l.b16 %v472
        %v505 = vpack.c.b16 %v490, %v489
        %v506 = vpack.c.b16 %v492, %v491
        %v507 = vpack.c.b16 %v494, %v493
        %v508 = vpack.c.b16 %v496, %v495
        %v509 = vpack.c.b16 %v498, %v497
        %v510 = vpack.c.b16 %v500, %v499
        %v511 = vpack.c.b16 %v502, %v501
        %v512 = vpack.c.b16 %v504, %v503
        %521 = vmatpush.bf16.msra.mxu0 %v512
        %522 = vmatpush.bf16.msra.mxu0 %v511
        %523 = vmatpush.bf16.msra.mxu0 %v510
        %524 = vmatpush.bf16.msra.mxu0 %v509
        %525 = vmatpush.bf16.msra.mxu0 %v508
        %526 = vmatpush.bf16.msra.mxu0 %v507
        %527 = vmatpush.bf16.msra.mxu0 %v506
        %528 = vmatpush.bf16.msra.mxu0 %v505
        %529 = vmatmul.bf16.gmra.mxu0 %v456
        %v530 = vpop.f32.mrf.mxu0
        %v531 = vadd.f32 0.0, %v530
        %v532 = vpop.f32.mrf.mxu0
        %v533 = vadd.f32 0.0, %v532
        %534 = vdwg.mxu0
        %v535 = vadd.f32 %v531, %v533
        %v536 = vrot.slane %v535, 4
        %v537 = vadd.f32 %v535, %v536
        %v538 = vrot.slane %v537, 2
        %v539 = vadd.f32 %v537, %v538
        %v540 = vrot.slane %v539, 1
        %v541 = vadd.f32 %v539, %v540
        %v542 = vmul.f32 %v531, %v531
        %v543 = vmul.f32 %v533, %v533
        %v544 = vadd.f32 %v542, %v543
        %v545 = vrot.slane %v544, 4
        %v546 = vadd.f32 %v544, %v545
        %v547 = vrot.slane %v546, 2
        %v548 = vadd.f32 %v546, %v547
        %v549 = vrot.slane %v548, 1
        %v550 = vadd.f32 %v548, %v549
        %v551 = vmul.f32 %v541, 0.0625
        %v552 = vmul.f32 %v550, 0.0625
        %v553 = vmul.f32 %v551, %v551
        %v554 = vsub.f32 %v552, %v553
        %v555 = vmax.f32 %v554, 0.0
        %v556 = vld [vmem:[%s368] sm:$0x1]
        %v557 = vadd.f32 %v555, 1e-05
        %v558 = vrsqrt.pop %v557
        %v559 = vmul.f32 %v558, %v557
        %v560 = vmul.f32 %v559, %v558
        %v561 = vmul.f32 0.5, %v560
        %v562 = vsub.f32 1.5, %v561
        %v563 = vmul.f32 %v558, %v562
        %vm564 = vweird.f32 %v557
        %vm565 = vweird.f32 %v558
        %vm566 = vmor %vm564, %vm565
        %v567 = vsel %vm566, %v558, %v563
        %v568 = vmul.f32 %v556, %v567
        %v569 = vld [vmem:[%s377] sm:$0x1]
        %v570 = vmul.f32 %v551, %v568
        %v571 = vsub.f32 %v569, %v570
        %v573 = vperm.slane %v568, 0
        %v575 = vmul.f32 %v531, %v573
        %v576 = vmul.f32 %v533, %v573
        %v578 = vperm.slane %v571, 0
        %v580 = vadd.f32 %v575, %v578
        %v581 = vadd.f32 %v576, %v578
        %v582 = vmax.f32 %v580, 0.0
        %v583 = vmax.f32 %v581, 0.0
        %v584 = vld [vmem:[%s429] sm:$0xff]
        %v585 = vld [vmem:[%s429 + $0x8] sm:$0xff]
        %v586 = vpack.c.bf16 %v583, %v582
        %v587 = vld [vmem:[%s387] sm:$0xf]
        %v588 = vld [vmem:[%s387 + $0x4] sm:$0xf]
        %v589 = vld [vmem:[%s387 + $0x8] sm:$0xf]
        %v590 = vld [vmem:[%s387 + $0xc] sm:$0xf]
        %v591 = vld [vmem:[%s387 + $0x10] sm:$0xf]
        %v592 = vld [vmem:[%s387 + $0x14] sm:$0xf]
        %v593 = vld [vmem:[%s387 + $0x18] sm:$0xf]
        %v594 = vld [vmem:[%s387 + $0x1c] sm:$0xf]
        %v595 = vld [vmem:[%s387 + $0x20] sm:$0xf]
        %v596 = vld [vmem:[%s387 + $0x24] sm:$0xf]
        %v597 = vld [vmem:[%s387 + $0x28] sm:$0xf]
        %v598 = vld [vmem:[%s387 + $0x2c] sm:$0xf]
        %v599 = vld [vmem:[%s387 + $0x30] sm:$0xf]
        %v600 = vld [vmem:[%s387 + $0x34] sm:$0xf]
        %v601 = vld [vmem:[%s387 + $0x38] sm:$0xf]
        %v602 = vld [vmem:[%s387 + $0x3c] sm:$0xf]
        %v619 = vunpack.c.l.b16 %v587
        %v620 = vunpack.c.l.b16 %v588
        %v621 = vunpack.c.l.b16 %v589
        %v622 = vunpack.c.l.b16 %v590
        %v623 = vunpack.c.l.b16 %v591
        %v624 = vunpack.c.l.b16 %v592
        %v625 = vunpack.c.l.b16 %v593
        %v626 = vunpack.c.l.b16 %v594
        %v627 = vunpack.c.l.b16 %v595
        %v628 = vunpack.c.l.b16 %v596
        %v629 = vunpack.c.l.b16 %v597
        %v630 = vunpack.c.l.b16 %v598
        %v631 = vunpack.c.l.b16 %v599
        %v632 = vunpack.c.l.b16 %v600
        %v633 = vunpack.c.l.b16 %v601
        %v634 = vunpack.c.l.b16 %v602
        %v635 = vpack.c.b16 %v620, %v619
        %v636 = vpack.c.b16 %v622, %v621
        %v637 = vpack.c.b16 %v624, %v623
        %v638 = vpack.c.b16 %v626, %v625
        %v639 = vpack.c.b16 %v628, %v627
        %v640 = vpack.c.b16 %v630, %v629
        %v641 = vpack.c.b16 %v632, %v631
        %v642 = vpack.c.b16 %v634, %v633
        %651 = vmatpush.bf16.msra.mxu0 %v642
        %652 = vmatpush.bf16.msra.mxu0 %v641
        %653 = vmatpush.bf16.msra.mxu0 %v640
        %654 = vmatpush.bf16.msra.mxu0 %v639
        %655 = vmatpush.bf16.msra.mxu0 %v638
        %656 = vmatpush.bf16.msra.mxu0 %v637
        %657 = vmatpush.bf16.msra.mxu0 %v636
        %658 = vmatpush.bf16.msra.mxu0 %v635
        %659 = vmatmul.bf16.gmra.mxu0 %v586
        %v660 = vpop.f32.mrf.mxu0
        %v661 = vadd.f32 0.0, %v660
        %v662 = vpop.f32.mrf.mxu0
        %v663 = vadd.f32 0.0, %v662
        %664 = vdwg.mxu0
        %v665 = vadd.f32 %v584, %v661
        %v666 = vadd.f32 %v585, %v663
        %667 = vst [vmem:[%s429] sm:$0xff] %v665
        %668 = vst [vmem:[%s429 + $0x8] sm:$0xff] %v666
        %s669 = sand.u32 %s209, 1
        %s670 = scalar_lea.sflag [#allocation4], %s669
        %s671 = sand.u32 %s209, 1
        %s672 = smul.addr %s671, 16
        %s673 = scalar_lea.vmem [#allocation11], %s672
        // Predicated region
        $region69: #{tpu_custom_call.1} parent=43 // pred_check
          %p674 = pneg %p219
        $region70: #{tpu_custom_call.1} parent=43 // pred_check_branch
          %676 = sbr.rel (%p674) target = $region72
        $region71: #{tpu_custom_call.1} parent=43 // pred_region
          %678 = vsyncadd %s670, 0
          %s679 = smul.addr %s31, 2
          %s680 = smul.addr %s679, 8
          %s681 = scalar_lea.hbm %s6, %s680
          %s682 = sshll.u32 %s673, 4
          %s683 = int_to_ptr.vmem [resolvable:$true] %s682
          %s684 = sshll.u32 %s681, 4
          %s685 = int_to_ptr.hbm [resolvable:$true] %s684
          %690 = dma.vmem_to_hbm [thread:$0]  %s683, 256, %s685, %s670, 128, 128, 8
        $region72: #{tpu_custom_call.1} parent=43 // pred_fallthru
          _
      $region44: #{tpu_custom_call.1} parent=5 // pred_fallthru
        _
      %p691 = scmp.le.s32.totalorder 2, %s22
      // Predicated region
      $region73: #{tpu_custom_call.1} parent=5 // pred_check
        %p692 = pneg %p691
      $region74: #{tpu_custom_call.1} parent=5 // pred_check_branch
        %694 = sbr.rel (%p692) target = $region76
      $region75: #{tpu_custom_call.1} parent=5 // pred_region
        %s695 = ssub.s32 %s22, 2
        // Predicated region
        $region77: #{tpu_custom_call.1} parent=75 // pred_check
          %p696 = pneg %p225
        $region78: #{tpu_custom_call.1} parent=75 // pred_check_branch
          %698 = sbr.rel (%p696) target = $region80
        $region79: #{tpu_custom_call.1} parent=75 // pred_region
          %s699 = sand.u32 %s210, 1
          %s700 = scalar_lea.sflag [#allocation4], %s699
          %s701 = sand.u32 %s210, 1
          %s702 = smul.addr %s701, 16
          %s703 = scalar_lea.vmem [#allocation11], %s702
          %705 = dma.done %s700, 256
        $region80: #{tpu_custom_call.1} parent=75 // pred_fallthru
          _
      $region76: #{tpu_custom_call.1} parent=5 // pred_fallthru
        _
    $region6: #{tpu_custom_call.1} parent=1 // loop_footer
      %s26 = sadd.s32 1, %s22
    $region7: #{tpu_custom_call.1} parent=1 // loop_footer_branch
      %21 = sbr.rel target = $region3
    $region8: #{tpu_custom_call.1} parent=1 // loop_exit
      _
    %706 = vsyncpa [#allocation3], 1
    %s707 = scalar_lea.sflag [#allocation3], 1
    %708 = vsyncpa %s707, 1
    %709 = vsyncpa [#allocation6], 1
    %s710 = scalar_lea.sflag [#allocation6], 1
    %711 = vsyncpa %s710, 1
    %712 = vsyncpa [#allocation9], 1
    %s713 = scalar_lea.sflag [#allocation9], 1
    %714 = vsyncpa %s713, 1
    %715 = vsyncpa [#allocation4], 1
    %s716 = scalar_lea.sflag [#allocation4], 1
    %717 = vsyncpa %s716, 1

</llo_original>
